<compile_context>
chip_gen: v7x
topology: tpu7x:2x2x1
jax: 0.10.0
libtpu: 0.0.40
codegen_flags: <defaults>
</compile_context>

<pallas_src>
import jax
import jax.numpy as jnp
from jax.experimental import pallas as pl
from jax.experimental.pallas import tpu as pltpu


def _round_up(x, m):
    return ((x + m - 1) // m) * m


def _cdiv(a, b):
    return (a + b - 1) // b


def _device_kind():
    try:
        return jax.devices()[0].device_kind.lower()
    except Exception:
        return ""


def _pick_tile(num_classes, hw, reduce_per_step, budget_bytes, target_tile=65536):
    """Largest lane tile (pixels) that keeps double-buffered blocks + scratch
    under the per-generation VMEM budget."""
    c_pad = _round_up(max(num_classes, 1), 8)
    per_pixel = 2 * c_pad * 4        # double-buffered logit blocks (f32-layout bound)
    per_pixel += 2 * 8 * 4           # double-buffered target blocks (sublane-padded)
    if not reduce_per_step:
        per_pixel += (3 * c_pad + 8) * 4   # full-width f32 accumulators
    tile = budget_bytes // per_pixel
    tile = min(tile, target_tile, _round_up(hw, 128))
    return max(128, (tile // 128) * 128)


def _make_kernel(num_classes, tile, hw, tiles_per_split, reduce_per_step):
    def kernel(x_ref, t_ref,
               inter_ref, psum_ref, tsum_ref, ce_ref,
               ce_acc, inter_acc, psum_acc, tsum_acc):
        i = pl.program_id(2)

        @pl.when(i == 0)
        def _():
            ce_acc[...] = jnp.zeros_like(ce_acc)
            inter_acc[...] = jnp.zeros_like(inter_acc)
            psum_acc[...] = jnp.zeros_like(psum_acc)
            tsum_acc[...] = jnp.zeros_like(tsum_acc)

        # Lane-validity mask for ragged / duplicated tail tiles (no host pad).
        blk = pl.program_id(0) * tiles_per_split + i
        start = blk * tile
        lane = jax.lax.broadcasted_iota(jnp.int32, (1, tile), 1)
        valid = (start + lane) < hw                       # (1, TILE) bool
        validf = valid.astype(jnp.float32)

        x = x_ref[0].astype(jnp.float32)                  # (C, TILE) lane-dense
        x = jnp.where(valid, x, 0.0)                      # kill garbage tail before exp
        t = t_ref[0].astype(jnp.int32)                    # (1, TILE), native-dtype stream

        # Numerically stable softmax / log-sum-exp over the class (sublane) axis.
        m = jnp.max(x, axis=0, keepdims=True)             # (1, TILE)
        ex = jnp.exp(x - m)                               # (C, TILE)
        se = jnp.sum(ex, axis=0, keepdims=True)           # (1, TILE)
        inv = 1.0 / se                                    # exact recip, hoisted to one row
        lse = m + jnp.log(se)                             # (1, TILE)
        prob = ex * inv                                   # (C, TILE)

        cls = jax.lax.broadcasted_iota(jnp.int32, (num_classes, tile), 0)
        onehot = (cls == t).astype(jnp.float32) * validf  # (C, TILE); 0 on invalid lanes
        logit_t = jnp.sum(x * onehot, axis=0, keepdims=True)

        ce_c = (lse - logit_t) * validf                   # (1, TILE)
        prob_m = prob * validf                            # (C, TILE)

        if reduce_per_step:
            # v5e: collapse lanes every step (XLU) -> tiny accumulators, avoids
            # saturating the single store slot with full-width RMWs.
            ce_acc[...] = ce_acc[...] + jnp.sum(ce_c, axis=1, keepdims=True)
            inter_acc[...] = inter_acc[...] + jnp.sum(prob_m * onehot, axis=1, keepdims=True)
            psum_acc[...] = psum_acc[...] + jnp.sum(prob_m, axis=1, keepdims=True)
            tsum_acc[...] = tsum_acc[...] + jnp.sum(onehot, axis=1, keepdims=True)
        else:
            # v6e/v7x: purely elementwise hot loop, lane collapse in epilogue.
            ce_acc[...] = ce_acc[...] + ce_c
            inter_acc[...] = inter_acc[...] + prob_m * onehot
            psum_acc[...] = psum_acc[...] + prob_m
            tsum_acc[...] = tsum_acc[...] + onehot

        @pl.when(i == pl.num_programs(2) - 1)
        def _():
            if reduce_per_step:
                inter_ref[0, 0] = inter_acc[...]
                psum_ref[0, 0] = psum_acc[...]
                tsum_ref[0, 0] = tsum_acc[...]
                ce_ref[0, 0] = ce_acc[...]
            else:
                inter_ref[0, 0] = jnp.sum(inter_acc[...], axis=1, keepdims=True)
                psum_ref[0, 0] = jnp.sum(psum_acc[...], axis=1, keepdims=True)
                tsum_ref[0, 0] = jnp.sum(tsum_acc[...], axis=1, keepdims=True)
                ce_ref[0, 0] = jnp.sum(ce_acc[...], axis=1, keepdims=True)

    return kernel


def combo_dice_loss(logits, target, smooth=1.0, tile=None):
    """logits: (N, C, H, W) float (any dtype); target: (N, H, W) int class ids."""
    N, C, H, W = logits.shape
    HW = H * W
    P = N * HW

    kind = _device_kind()
    is_v5e = ("v5 lite" in kind) or ("v5e" in kind) or ("v5lite" in kind)
    is_v7 = ("7x" in kind) or ("v7" in kind)
    reduce_per_step = is_v5e

    # Per-generation residency budget (v7x: 64 MiB physical VMEM only).
    budget = (24 << 20) if is_v7 else (40 << 20)
    if tile is None:
        tile = _pick_tile(C, HW, reduce_per_step, budget)

    # NCHW consumed natively: free reshape, no transpose, no host pad/upcast.
    x = logits.reshape(N, C, HW)
    t = target.reshape(N, 1, HW)          # native (possibly narrow) dtype

    n_blocks = _cdiv(HW, tile)
    S = 2 if n_blocks >= 2 else 1         # pixel-axis split -> both v7x cores busy
    tiles_per_split = _cdiv(n_blocks, S)
    needs_clamp = S * tiles_per_split > n_blocks

    # Explicit scoped-VMEM limit sized to actual residency (+ margin).
    c_pad = _round_up(max(C, 1), 8)
    resid = tile * (2 * c_pad * 4 + 2 * 8 * 4)
    if not reduce_per_step:
        resid += tile * (3 * c_pad + 8) * 4
    vmem_cap = (52 << 20) if is_v7 else (96 << 20)
    vmem_limit = int(min(vmem_cap, max(32 << 20, resid + (8 << 20))))

    kernel = _make_kernel(C, tile, HW, tiles_per_split, reduce_per_step)

    if reduce_per_step:
        scratch = [pltpu.VMEM((1, 1), jnp.float32),      # CE accumulator
                   pltpu.VMEM((C, 1), jnp.float32),      # intersection
                   pltpu.VMEM((C, 1), jnp.float32),      # prob sum
                   pltpu.VMEM((C, 1), jnp.float32)]      # target count
    else:
        scratch = [pltpu.VMEM((1, tile), jnp.float32),
                   pltpu.VMEM((C, tile), jnp.float32),
                   pltpu.VMEM((C, tile), jnp.float32),
                   pltpu.VMEM((C, tile), jnp.float32)]

    def in_blk(s, n, i):
        blk = s * tiles_per_split + i
        if needs_clamp:
            blk = jnp.minimum(blk, n_blocks - 1)   # re-read last block; masked in-kernel
        return (n, 0, blk)

    inter_p, psum_p, tsum_p, ce_p = pl.pallas_call(
        kernel,
        out_shape=(jax.ShapeDtypeStruct((S, N, C, 1), jnp.float32),
                   jax.ShapeDtypeStruct((S, N, C, 1), jnp.float32),
                   jax.ShapeDtypeStruct((S, N, C, 1), jnp.float32),
                   jax.ShapeDtypeStruct((S, N, 1, 1), jnp.float32)),
        grid_spec=pltpu.PrefetchScalarGridSpec(
            num_scalar_prefetch=0,
            grid=(S, N, tiles_per_split),
            in_specs=[
                pl.BlockSpec((1, C, tile), in_blk),
                pl.BlockSpec((1, 1, tile), in_blk),
            ],
            out_specs=(
                pl.BlockSpec((1, 1, C, 1), lambda s, n, i: (s, n, 0, 0)),
                pl.BlockSpec((1, 1, C, 1), lambda s, n, i: (s, n, 0, 0)),
                pl.BlockSpec((1, 1, C, 1), lambda s, n, i: (s, n, 0, 0)),
                pl.BlockSpec((1, 1, 1, 1), lambda s, n, i: (s, n, 0, 0)),
            ),
            scratch_shapes=scratch,
        ),
        compiler_params=pltpu.CompilerParams(
            dimension_semantics=("parallel", "parallel", "arbitrary"),
            vmem_limit_bytes=vmem_limit),
    )(x, t)

    # Tiny JAX-side combine over (split, batch) partials.
    inter = jnp.sum(inter_p[..., 0], axis=(0, 1))        # (C,)
    psum = jnp.sum(psum_p[..., 0], axis=(0, 1))          # (C,)
    tsum = jnp.sum(tsum_p[..., 0], axis=(0, 1))          # (C,)
    ce = jnp.sum(ce_p) / jnp.float32(P)
    dice = (2.0 * inter + smooth) / (psum + tsum + smooth)
    return (1.0 - jnp.mean(dice)) + ce


def _reference_combo_dice_loss(logits, target, smooth=1.0):
    """Pure-JAX reference mirroring the PyTorch module (for sanity checking)."""
    N, C, H, W = logits.shape
    x = jnp.transpose(logits, (0, 2, 3, 1)).reshape(-1, C).astype(jnp.float32)
    t = target.reshape(-1)
    lse = jax.scipy.special.logsumexp(x, axis=1)
    ce = jnp.mean(lse - x[jnp.arange(x.shape[0]), t])
    prob = jax.nn.softmax(x, axis=1)
    onehot = jax.nn.one_hot(t, C, dtype=jnp.float32)
    inter = jnp.sum(prob * onehot, axis=0)
    dice = (2.0 * inter + smooth) / (jnp.sum(prob, axis=0) + jnp.sum(onehot, axis=0) + smooth)
    return (1.0 - jnp.mean(dice)) + ce


if __name__ == "__main__":
    key = jax.random.PRNGKey(0)
    k1, k2 = jax.random.split(key)
    N, C, H, W = 2, 4, 16, 16
    logits = jax.random.normal(k1, (N, C, H, W), dtype=jnp.float32)
    target = jax.random.randint(k2, (N, H, W), 0, C, dtype=jnp.int32)

    loss = combo_dice_loss(logits, target, smooth=1.0)
    loss = jax.block_until_ready(loss)

    ref = jax.block_until_ready(_reference_combo_dice_loss(logits, target, smooth=1.0))
    assert jnp.allclose(loss, ref, rtol=1e-5, atol=1e-5), (loss, ref)

    print("KERNEL_OK")
</pallas_src>

<mosaic_0001>
module attributes {stable_mosaic.version = 11 : i64} {
  func.func @kernel(%arg0: i32, %arg1: i32, %arg2: i32, %arg3: memref<1x4x256xf32, #tpu.memory_space<vmem>>, %arg4: memref<1x1x256xi32, #tpu.memory_space<vmem>>, %arg5: memref<1x1x4x1xf32, #tpu.memory_space<vmem>>, %arg6: memref<1x1x4x1xf32, #tpu.memory_space<vmem>>, %arg7: memref<1x1x4x1xf32, #tpu.memory_space<vmem>>, %arg8: memref<1x1x1x1xf32, #tpu.memory_space<vmem>>, %arg9: memref<1x256xf32, #tpu.memory_space<vmem>>, %arg10: memref<4x256xf32, #tpu.memory_space<vmem>>, %arg11: memref<4x256xf32, #tpu.memory_space<vmem>>, %arg12: memref<4x256xf32, #tpu.memory_space<vmem>>) attributes {dimension_semantics = [#tpu.dimension_semantics<parallel>, #tpu.dimension_semantics<parallel>, #tpu.dimension_semantics<arbitrary>], iteration_bounds = array<i64: 1, 2, 1>, scalar_prefetch = 0 : i64, scratch_operands = 4 : i64, tpu.core_type = #tpu.core_type<tc>, window_params = [{transform_indices = @transform_0, window_bounds = array<i64: 1, 4, 256>}, {transform_indices = @transform_1, window_bounds = array<i64: 1, 1, 256>}, {transform_indices = @transform_2, window_bounds = array<i64: 1, 1, 4, 1>}, {transform_indices = @transform_3, window_bounds = array<i64: 1, 1, 4, 1>}, {transform_indices = @transform_4, window_bounds = array<i64: 1, 1, 4, 1>}, {transform_indices = @transform_5, window_bounds = array<i64: 1, 1, 1, 1>}]} {
    %c0_i32 = arith.constant 0 : i32
    %0 = arith.cmpi eq, %arg2, %c0_i32 : i32
    %1 = arith.extui %0 : i1 to i32
    %c0_i32_0 = arith.constant 0 : i32
    %2 = arith.cmpi ne, %1, %c0_i32_0 : i32
    scf.if %2 {
      %cst_29 = arith.constant 0.000000e+00 : f32
      %64 = vector.broadcast %cst_29 : f32 to vector<1x256xf32>
      %c0_30 = arith.constant 0 : index
      %c0_31 = arith.constant 0 : index
      %65 = vector.load %arg9[%c0_30, %c0_31] : memref<1x256xf32, #tpu.memory_space<vmem>>, vector<1x256xf32>
      tpu.vector_store %arg9[%c0_30, %c0_31], %64 {strides = array<i32>} : memref<1x256xf32, #tpu.memory_space<vmem>>, vector<1x256xf32>,
      %cst_32 = arith.constant 0.000000e+00 : f32
      %66 = vector.broadcast %cst_32 : f32 to vector<4x256xf32>
      %c0_33 = arith.constant 0 : index
      %c0_34 = arith.constant 0 : index
      %67 = vector.load %arg10[%c0_33, %c0_34] : memref<4x256xf32, #tpu.memory_space<vmem>>, vector<4x256xf32>
      tpu.vector_store %arg10[%c0_33, %c0_34], %66 {strides = array<i32>} : memref<4x256xf32, #tpu.memory_space<vmem>>, vector<4x256xf32>,
      %cst_35 = arith.constant 0.000000e+00 : f32
      %68 = vector.broadcast %cst_35 : f32 to vector<4x256xf32>
      %c0_36 = arith.constant 0 : index
      %c0_37 = arith.constant 0 : index
      %69 = vector.load %arg11[%c0_36, %c0_37] : memref<4x256xf32, #tpu.memory_space<vmem>>, vector<4x256xf32>
      tpu.vector_store %arg11[%c0_36, %c0_37], %68 {strides = array<i32>} : memref<4x256xf32, #tpu.memory_space<vmem>>, vector<4x256xf32>,
      %cst_38 = arith.constant 0.000000e+00 : f32
      %70 = vector.broadcast %cst_38 : f32 to vector<4x256xf32>
      %c0_39 = arith.constant 0 : index
      %c0_40 = arith.constant 0 : index
      %71 = vector.load %arg12[%c0_39, %c0_40] : memref<4x256xf32, #tpu.memory_space<vmem>>, vector<4x256xf32>
      tpu.vector_store %arg12[%c0_39, %c0_40], %70 {strides = array<i32>} : memref<4x256xf32, #tpu.memory_space<vmem>>, vector<4x256xf32>,
    } else {
    }
    %c1_i32 = arith.constant 1 : i32
    %3 = arith.muli %arg0, %c1_i32 : i32
    %4 = arith.addi %3, %arg2 : i32
    %c256_i32 = arith.constant 256 : i32
    %5 = arith.muli %4, %c256_i32 : i32
    %6 = tpu.iota {dimensions = array<i32: 1>} : vector<1x256xi32>
    %7 = vector.broadcast %5 : i32 to vector<1x256xi32>
    %8 = arith.addi %7, %6 : vector<1x256xi32>
    %c256_i32_1 = arith.constant 256 : i32
    %9 = vector.broadcast %c256_i32_1 : i32 to vector<1x256xi32>
    %10 = arith.cmpi slt, %8, %9 : vector<1x256xi32>
    %11 = arith.extui %10 : vector<1x256xi1> to vector<1x256xi32>
    %12 = arith.sitofp %11 : vector<1x256xi32> to vector<1x256xf32>
    %c0 = arith.constant 0 : index
    %c0_2 = arith.constant 0 : index
    %c0_3 = arith.constant 0 : index
    %13 = vector.load %arg3[%c0, %c0_2, %c0_3] : memref<1x4x256xf32, #tpu.memory_space<vmem>>, vector<1x4x256xf32>
    %14 = vector.shape_cast %13 : vector<1x4x256xf32> to vector<4x256xf32>
    %cst = arith.constant 0.000000e+00 : f32
    %15 = vector.shape_cast %10 : vector<1x256xi1> to vector<1x256xi1>
    %16 = vector.broadcast %15 : vector<1x256xi1> to vector<4x256xi1>
    %17 = vector.broadcast %cst : f32 to vector<4x256xf32>
    %18 = arith.select %16, %14, %17 : vector<4x256xi1>, vector<4x256xf32>
    %c0_4 = arith.constant 0 : index
    %c0_5 = arith.constant 0 : index
    %c0_6 = arith.constant 0 : index
    %19 = vector.load %arg4[%c0_4, %c0_5, %c0_6] : memref<1x1x256xi32, #tpu.memory_space<vmem>>, vector<1x1x256xi32>
    %20 = vector.shape_cast %19 : vector<1x1x256xi32> to vector<1x256xi32>
    %cst_7 = arith.constant dense<0xFF800000> : vector<256xf32>
    %21 = vector.multi_reduction <maximumf>, %18, %cst_7 [0] : vector<4x256xf32> to vector<256xf32>
    %22 = vector.shape_cast %21 : vector<256xf32> to vector<1x256xf32>
    %23 = vector.broadcast %22 : vector<1x256xf32> to vector<4x256xf32>
    %24 = arith.subf %18, %23 : vector<4x256xf32>
    %25 = math.exp %24 : vector<4x256xf32>
    %cst_8 = arith.constant dense<0.000000e+00> : vector<256xf32>
    %26 = vector.multi_reduction <add>, %25, %cst_8 [0] : vector<4x256xf32> to vector<256xf32>
    %27 = vector.shape_cast %26 : vector<256xf32> to vector<1x256xf32>
    %cst_9 = arith.constant 1.000000e+00 : f32
    %28 = vector.broadcast %cst_9 : f32 to vector<1x256xf32>
    %29 = arith.divf %28, %27 : vector<1x256xf32>
    %30 = math.log %27 : vector<1x256xf32>
    %31 = arith.addf %22, %30 : vector<1x256xf32>
    %32 = vector.broadcast %29 : vector<1x256xf32> to vector<4x256xf32>
    %33 = arith.mulf %25, %32 : vector<4x256xf32>
    %34 = tpu.iota {dimensions = array<i32: 0>} : vector<4x256xi32>
    %35 = vector.broadcast %20 : vector<1x256xi32> to vector<4x256xi32>
    %36 = arith.cmpi eq, %34, %35 : vector<4x256xi32>
    %37 = arith.extui %36 : vector<4x256xi1> to vector<4x256xi32>
    %38 = arith.sitofp %37 : vector<4x256xi32> to vector<4x256xf32>
    %39 = vector.broadcast %12 : vector<1x256xf32> to vector<4x256xf32>
    %40 = arith.mulf %38, %39 : vector<4x256xf32>
    %41 = arith.mulf %18, %40 : vector<4x256xf32>
    %cst_10 = arith.constant dense<0.000000e+00> : vector<256xf32>
    %42 = vector.multi_reduction <add>, %41, %cst_10 [0] : vector<4x256xf32> to vector<256xf32>
    %43 = vector.shape_cast %42 : vector<256xf32> to vector<1x256xf32>
    %44 = arith.subf %31, %43 : vector<1x256xf32>
    %45 = arith.mulf %44, %12 : vector<1x256xf32>
    %46 = vector.broadcast %12 : vector<1x256xf32> to vector<4x256xf32>
    %47 = arith.mulf %33, %46 : vector<4x256xf32>
    %c0_11 = arith.constant 0 : index
    %c0_12 = arith.constant 0 : index
    %48 = vector.load %arg9[%c0_11, %c0_12] : memref<1x256xf32, #tpu.memory_space<vmem>>, vector<1x256xf32>
    %49 = arith.addf %48, %45 : vector<1x256xf32>
    %c0_13 = arith.constant 0 : index
    %c0_14 = arith.constant 0 : index
    %50 = vector.load %arg9[%c0_13, %c0_14] : memref<1x256xf32, #tpu.memory_space<vmem>>, vector<1x256xf32>
    tpu.vector_store %arg9[%c0_13, %c0_14], %49 {strides = array<i32>} : memref<1x256xf32, #tpu.memory_space<vmem>>, vector<1x256xf32>,
    %c0_15 = arith.constant 0 : index
    %c0_16 = arith.constant 0 : index
    %51 = vector.load %arg10[%c0_15, %c0_16] : memref<4x256xf32, #tpu.memory_space<vmem>>, vector<4x256xf32>
    %52 = arith.mulf %47, %40 : vector<4x256xf32>
    %53 = arith.addf %51, %52 : vector<4x256xf32>
    %c0_17 = arith.constant 0 : index
    %c0_18 = arith.constant 0 : index
    %54 = vector.load %arg10[%c0_17, %c0_18] : memref<4x256xf32, #tpu.memory_space<vmem>>, vector<4x256xf32>
    tpu.vector_store %arg10[%c0_17, %c0_18], %53 {strides = array<i32>} : memref<4x256xf32, #tpu.memory_space<vmem>>, vector<4x256xf32>,
    %c0_19 = arith.constant 0 : index
    %c0_20 = arith.constant 0 : index
    %55 = vector.load %arg11[%c0_19, %c0_20] : memref<4x256xf32, #tpu.memory_space<vmem>>, vector<4x256xf32>
    %56 = arith.addf %55, %47 : vector<4x256xf32>
    %c0_21 = arith.constant 0 : index
    %c0_22 = arith.constant 0 : index
    %57 = vector.load %arg11[%c0_21, %c0_22] : memref<4x256xf32, #tpu.memory_space<vmem>>, vector<4x256xf32>
    tpu.vector_store %arg11[%c0_21, %c0_22], %56 {strides = array<i32>} : memref<4x256xf32, #tpu.memory_space<vmem>>, vector<4x256xf32>,
    %c0_23 = arith.constant 0 : index
    %c0_24 = arith.constant 0 : index
    %58 = vector.load %arg12[%c0_23, %c0_24] : memref<4x256xf32, #tpu.memory_space<vmem>>, vector<4x256xf32>
    %59 = arith.addf %58, %40 : vector<4x256xf32>
    %c0_25 = arith.constant 0 : index
    %c0_26 = arith.constant 0 : index
    %60 = vector.load %arg12[%c0_25, %c0_26] : memref<4x256xf32, #tpu.memory_space<vmem>>, vector<4x256xf32>
    tpu.vector_store %arg12[%c0_25, %c0_26], %59 {strides = array<i32>} : memref<4x256xf32, #tpu.memory_space<vmem>>, vector<4x256xf32>,
    %c0_i32_27 = arith.constant 0 : i32
    %61 = arith.cmpi eq, %arg2, %c0_i32_27 : i32
    %62 = arith.extui %61 : i1 to i32
    %c0_i32_28 = arith.constant 0 : i32
    %63 = arith.cmpi ne, %62, %c0_i32_28 : i32
    scf.if %63 {
      %c0_29 = arith.constant 0 : index
      %c0_30 = arith.constant 0 : index
      %64 = vector.load %arg10[%c0_29, %c0_30] : memref<4x256xf32, #tpu.memory_space<vmem>>, vector<4x256xf32>
      %cst_31 = arith.constant dense<0.000000e+00> : vector<4xf32>
      %65 = vector.multi_reduction <add>, %64, %cst_31 [1] : vector<4x256xf32> to vector<4xf32>
      %66 = vector.shape_cast %65 : vector<4xf32> to vector<4x1xf32>
      %c0_32 = arith.constant 0 : index
      %c0_33 = arith.constant 0 : index
      %c0_34 = arith.constant 0 : index
      %c0_35 = arith.constant 0 : index
      %67 = vector.load %arg5[%c0_32, %c0_33, %c0_34, %c0_35] : memref<1x1x4x1xf32, #tpu.memory_space<vmem>>, vector<1x1x4x1xf32>
      %68 = vector.shape_cast %67 : vector<1x1x4x1xf32> to vector<4x1xf32>
      %69 = vector.shape_cast %66 : vector<4x1xf32> to vector<1x1x4x1xf32>
      tpu.vector_store %arg5[%c0_32, %c0_33, %c0_34, %c0_35], %69 {strides = array<i32>} : memref<1x1x4x1xf32, #tpu.memory_space<vmem>>, vector<1x1x4x1xf32>,
      %c0_36 = arith.constant 0 : index
      %c0_37 = arith.constant 0 : index
      %70 = vector.load %arg11[%c0_36, %c0_37] : memref<4x256xf32, #tpu.memory_space<vmem>>, vector<4x256xf32>
      %cst_38 = arith.constant dense<0.000000e+00> : vector<4xf32>
      %71 = vector.multi_reduction <add>, %70, %cst_38 [1] : vector<4x256xf32> to vector<4xf32>
      %72 = vector.shape_cast %71 : vector<4xf32> to vector<4x1xf32>
      %c0_39 = arith.constant 0 : index
      %c0_40 = arith.constant 0 : index
      %c0_41 = arith.constant 0 : index
      %c0_42 = arith.constant 0 : index
      %73 = vector.load %arg6[%c0_39, %c0_40, %c0_41, %c0_42] : memref<1x1x4x1xf32, #tpu.memory_space<vmem>>, vector<1x1x4x1xf32>
      %74 = vector.shape_cast %73 : vector<1x1x4x1xf32> to vector<4x1xf32>
      %75 = vector.shape_cast %72 : vector<4x1xf32> to vector<1x1x4x1xf32>
      tpu.vector_store %arg6[%c0_39, %c0_40, %c0_41, %c0_42], %75 {strides = array<i32>} : memref<1x1x4x1xf32, #tpu.memory_space<vmem>>, vector<1x1x4x1xf32>,
      %c0_43 = arith.constant 0 : index
      %c0_44 = arith.constant 0 : index
      %76 = vector.load %arg12[%c0_43, %c0_44] : memref<4x256xf32, #tpu.memory_space<vmem>>, vector<4x256xf32>
      %cst_45 = arith.constant dense<0.000000e+00> : vector<4xf32>
      %77 = vector.multi_reduction <add>, %76, %cst_45 [1] : vector<4x256xf32> to vector<4xf32>
      %78 = vector.shape_cast %77 : vector<4xf32> to vector<4x1xf32>
      %c0_46 = arith.constant 0 : index
      %c0_47 = arith.constant 0 : index
      %c0_48 = arith.constant 0 : index
      %c0_49 = arith.constant 0 : index
      %79 = vector.load %arg7[%c0_46, %c0_47, %c0_48, %c0_49] : memref<1x1x4x1xf32, #tpu.memory_space<vmem>>, vector<1x1x4x1xf32>
      %80 = vector.shape_cast %79 : vector<1x1x4x1xf32> to vector<4x1xf32>
      %81 = vector.shape_cast %78 : vector<4x1xf32> to vector<1x1x4x1xf32>
      tpu.vector_store %arg7[%c0_46, %c0_47, %c0_48, %c0_49], %81 {strides = array<i32>} : memref<1x1x4x1xf32, #tpu.memory_space<vmem>>, vector<1x1x4x1xf32>,
      %c0_50 = arith.constant 0 : index
      %c0_51 = arith.constant 0 : index
      %82 = vector.load %arg9[%c0_50, %c0_51] : memref<1x256xf32, #tpu.memory_space<vmem>>, vector<1x256xf32>
      %cst_52 = arith.constant dense<0.000000e+00> : vector<1xf32>
      %83 = vector.multi_reduction <add>, %82, %cst_52 [1] : vector<1x256xf32> to vector<1xf32>
      %84 = vector.shape_cast %83 : vector<1xf32> to vector<1x1xf32>
      %c0_53 = arith.constant 0 : index
      %c0_54 = arith.constant 0 : index
      %c0_55 = arith.constant 0 : index
      %c0_56 = arith.constant 0 : index
      %85 = vector.load %arg8[%c0_53, %c0_54, %c0_55, %c0_56] : memref<1x1x1x1xf32, #tpu.memory_space<vmem>>, vector<1x1x1x1xf32>
      %86 = vector.shape_cast %85 : vector<1x1x1x1xf32> to vector<1x1xf32>
      %87 = vector.shape_cast %84 : vector<1x1xf32> to vector<1x1x1x1xf32>
      tpu.vector_store %arg8[%c0_53, %c0_54, %c0_55, %c0_56], %87 {strides = array<i32>} : memref<1x1x1x1xf32, #tpu.memory_space<vmem>>, vector<1x1x1x1xf32>,
    } else {
    }
    return
  }
  func.func @transform_0(%arg0: i32, %arg1: i32, %arg2: i32) -> (i32, i32, i32) {
    %c1_i32 = arith.constant 1 : i32
    %0 = arith.muli %arg0, %c1_i32 : i32
    %1 = arith.addi %0, %arg2 : i32
    %c0_i32 = arith.constant 0 : i32
    %c0_i32_0 = arith.constant 0 : i32
    return %arg1, %c0_i32, %1 : i32, i32, i32
  }
  func.func @transform_1(%arg0: i32, %arg1: i32, %arg2: i32) -> (i32, i32, i32) {
    %c1_i32 = arith.constant 1 : i32
    %0 = arith.muli %arg0, %c1_i32 : i32
    %1 = arith.addi %0, %arg2 : i32
    %c0_i32 = arith.constant 0 : i32
    %c0_i32_0 = arith.constant 0 : i32
    return %arg1, %c0_i32, %1 : i32, i32, i32
  }
  func.func @transform_2(%arg0: i32, %arg1: i32, %arg2: i32) -> (i32, i32, i32, i32) {
    %c0_i32 = arith.constant 0 : i32
    %c0_i32_0 = arith.constant 0 : i32
    %c0_i32_1 = arith.constant 0 : i32
    return %arg0, %arg1, %c0_i32, %c0_i32_0 : i32, i32, i32, i32
  }
  func.func @transform_3(%arg0: i32, %arg1: i32, %arg2: i32) -> (i32, i32, i32, i32) {
    %c0_i32 = arith.constant 0 : i32
    %c0_i32_0 = arith.constant 0 : i32
    %c0_i32_1 = arith.constant 0 : i32
    return %arg0, %arg1, %c0_i32, %c0_i32_0 : i32, i32, i32, i32
  }
  func.func @transform_4(%arg0: i32, %arg1: i32, %arg2: i32) -> (i32, i32, i32, i32) {
    %c0_i32 = arith.constant 0 : i32
    %c0_i32_0 = arith.constant 0 : i32
    %c0_i32_1 = arith.constant 0 : i32
    return %arg0, %arg1, %c0_i32, %c0_i32_0 : i32, i32, i32, i32
  }
  func.func @transform_5(%arg0: i32, %arg1: i32, %arg2: i32) -> (i32, i32, i32, i32) {
    %c0_i32 = arith.constant 0 : i32
    %c0_i32_0 = arith.constant 0 : i32
    %c0_i32_1 = arith.constant 0 : i32
    return %arg0, %arg1, %c0_i32, %c0_i32_0 : i32, i32, i32, i32
  }
}

</mosaic_0001>

<llo_original>
// kernel: tpu_custom_call.1
$region0: #{tpu_custom_call.1}
  #allocation0 [shape = 'u32[]', space=smem, size = 0x4, offset = 0x4, fixed_abs, tag = 'smem constant byte address 0x4 - core index']
  #allocation1 [shape = 'u32[144,128]{1,0:T(1,128)}', space=vmem, size = 0x12000, scoped, tag = 'internal scratch']
  #allocation2 [shape = 'f32[1,256]{1,0:T(1,128)}', space=vmem, size = 0x400, scoped, tag = 'scratch operand']
  #allocation3 [shape = 'f32[4,256]{1,0:T(4,128)}', space=vmem, size = 0x1000, scoped, tag = 'scratch operand']
  #allocation4 [shape = 'f32[4,256]{1,0:T(4,128)}', space=vmem, size = 0x1000, scoped, tag = 'scratch operand']
  #allocation5 [shape = 'f32[4,256]{1,0:T(4,128)}', space=vmem, size = 0x1000, scoped, tag = 'scratch operand']
  %s0 = inlined_call_operand.hbm [shape: f32[2,4,256], index: 0, kind: input, shape index: {}]
  %s1 = inlined_call_operand.hbm [shape: s32[2,1,256], index: 1, kind: input, shape index: {}]
  %s2 = inlined_call_operand.vmem [shape: f32[1,2,4,1], index: 2, kind: output, shape index: {0}]
  %s3 = inlined_call_operand.vmem [shape: f32[1,2,4,1], index: 3, kind: output, shape index: {1}]
  %s4 = inlined_call_operand.vmem [shape: f32[1,2,4,1], index: 4, kind: output, shape index: {2}]
  %s5 = inlined_call_operand.vmem [shape: f32[1,2,1,1], index: 5, kind: output, shape index: {3}]
  %6 = xla_tuple %s2, %s3, %s4, %s5
  %s7 = sld [smem:[#allocation0]]
  $region81: #{tpu_custom_call.1} parent=0
    _
  %s9 = ssub.s32 1, %s7
  %s10 = scalar_select 0, %s9, %s7
  $region1: #{tpu_custom_call.1} parent=0
    #allocation6 [shape = 'u8[8192]{0}', space=vmem, size = 0x2000, scoped, tag = 'input window, operand 0']
    #allocation7 [shape = 's32[2]{0}', space=sflag, size = 0x8, scoped, tag = 'scoped memory for tpu_custom_call.1']
    #allocation8 [shape = 'u8[2048]{0}', space=vmem, size = 0x800, scoped, tag = 'input window, operand 1']
    #allocation9 [shape = 's32[2]{0}', space=sflag, size = 0x8, scoped, tag = 'scoped memory for tpu_custom_call.1']
    %11 = vsyncpa [#allocation7], 0
    %s12 = scalar_lea.sflag [#allocation7], 1
    %13 = vsyncpa %s12, 0
    %14 = vsyncpa [#allocation9], 0
    %s15 = scalar_lea.sflag [#allocation9], 1
    %16 = vsyncpa %s15, 0
    loop: start=0, step=1, limit=4
    $region2: #{tpu_custom_call.1} parent=1 // loop_pre_header
      _
    $region3: #{tpu_custom_call.1} parent=1 // loop_header
      %s18 = sphi 0, %s22
      %p19 = scmp.ge.s32.totalorder %s18, 4
      %s25 = sphi 0, %s44
      %s26 = sphi 0, %s40
      %s27 = sphi 0, %s36
      %s28 = sphi 0, %s25
      %s29 = sphi 0, %s26
      %s30 = sphi 0, %s27
      %s31 = sphi 0, %s28
      %s32 = sphi 0, %s29
      %s33 = sphi 0, %s30
      %s51 = sphi 0, %s53
      %s54 = sphi 0, %s51
      %s55 = sphi 0, %s54
      %s71 = sphi 0, %s55
      %s81 = sphi 0, %s83
      %s84 = sphi 0, %s81
      %s85 = sphi 0, %s84
      %s101 = sphi 0, %s85
      %s109 = sphi 0, %s111
      %s112 = sphi 0, %s109
      %s113 = sphi 0, %s112
      %s129 = sphi 0, %s113
      %s137 = sphi 0, %s139
      %s140 = sphi 0, %s137
      %s141 = sphi 0, %s140
      %s157 = sphi 0, %s141
      %s165 = sphi 0, %s167
      %s168 = sphi 0, %s165
      %s169 = sphi 0, %s168
      %s185 = sphi 0, %s169
      %s193 = sphi 0, %s195
      %s196 = sphi 0, %s193
      %s197 = sphi 0, %s196
      %s213 = sphi 0, %s197
    $region4: #{tpu_custom_call.1} parent=1 // loop_header_branch
      %21 = sbr.rel (%p19) target = $region8
    $region5: #{tpu_custom_call.1} parent=1 // loop_body
      %s23 = ssub.s32 %s18, 1
      %s24 = ssub.s32 %s18, 2
      %s34 = sadd.s32 1, %s27
      %p35 = scmp.ge.s32.totalorder %s34, 1
      %s36 = scalar_select %p35, 0, %s34
      %s37 = sadd.s32 1, %s26
      %s38 = scalar_select %p35, %s37, %s26
      %p39 = scmp.ge.s32.totalorder %s38, 2
      %s40 = scalar_select %p39, 0, %s38
      %s41 = sadd.s32 1, %s25
      %s42 = scalar_select %p39, %s41, %s25
      %p43 = scmp.ge.s32.totalorder %s42, 1
      %s44 = scalar_select %p43, 0, %s42
      %s45 = sadd.s32 %s25, %s27
      %s46 = sadd.s32 %s44, %s36
      %s47 = ssub.s32 %s26, %s40
      %s48 = ssub.s32 %s45, %s46
      %s49 = sor.u32 %s47, %s48
      %p50 = scmp.eq.s32.totalorder %s49, 0
      %s52 = sadd.s32 %s51, 1
      %s53 = scalar_select %p50, %s51, %s52
      %p56 = pneg %p50
      %p57 = scmp.eq.s32.totalorder %s18, 1
      %p58 = por %p56, %p57
      %p59 = scmp.ne.s32.totalorder %s51, %s54
      %p60 = scmp.eq.s32.totalorder %s18, 0
      %p61 = por %p59, %p60
      %p62 = scmp.ne.s32.totalorder %s51, %s54
      %p63 = scmp.eq.s32.totalorder %s23, 1
      %p64 = por %p62, %p63
      %p65 = scmp.ne.s32.totalorder %s54, %s55
      %p66 = scmp.eq.s32.totalorder %s23, 0
      %p67 = por %p65, %p66
      %p68 = scmp.ne.s32.totalorder %s54, %s55
      %p69 = scmp.eq.s32.totalorder %s24, 1
      %p70 = por %p68, %p69
      %p72 = scmp.ne.s32.totalorder %s55, %s71
      %p73 = scmp.eq.s32.totalorder %s24, 0
      %p74 = por %p72, %p73
      %s75 = sadd.s32 %s25, %s27
      %s76 = sadd.s32 %s44, %s36
      %s77 = ssub.s32 %s26, %s40
      %s78 = ssub.s32 %s75, %s76
      %s79 = sor.u32 %s77, %s78
      %p80 = scmp.eq.s32.totalorder %s79, 0
      %s82 = sadd.s32 %s81, 1
      %s83 = scalar_select %p80, %s81, %s82
      %p86 = pneg %p80
      %p87 = scmp.eq.s32.totalorder %s18, 1
      %p88 = por %p86, %p87
      %p89 = scmp.ne.s32.totalorder %s81, %s84
      %p90 = scmp.eq.s32.totalorder %s18, 0
      %p91 = por %p89, %p90
      %p92 = scmp.ne.s32.totalorder %s81, %s84
      %p93 = scmp.eq.s32.totalorder %s23, 1
      %p94 = por %p92, %p93
      %p95 = scmp.ne.s32.totalorder %s84, %s85
      %p96 = scmp.eq.s32.totalorder %s23, 0
      %p97 = por %p95, %p96
      %p98 = scmp.ne.s32.totalorder %s84, %s85
      %p99 = scmp.eq.s32.totalorder %s24, 1
      %p100 = por %p98, %p99
      %p102 = scmp.ne.s32.totalorder %s85, %s101
      %p103 = scmp.eq.s32.totalorder %s24, 0
      %p104 = por %p102, %p103
      %s105 = ssub.s32 %s25, %s44
      %s106 = ssub.s32 %s26, %s40
      %s107 = sor.u32 %s105, %s106
      %p108 = scmp.eq.s32.totalorder %s107, 0
      %s110 = sadd.s32 %s109, 1
      %s111 = scalar_select %p108, %s109, %s110
      %p114 = pneg %p108
      %p115 = scmp.eq.s32.totalorder %s18, 1
      %p116 = por %p114, %p115
      %p117 = scmp.ne.s32.totalorder %s109, %s112
      %p118 = scmp.eq.s32.totalorder %s18, 0
      %p119 = por %p117, %p118
      %p120 = scmp.ne.s32.totalorder %s109, %s112
      %p121 = scmp.eq.s32.totalorder %s23, 1
      %p122 = por %p120, %p121
      %p123 = scmp.ne.s32.totalorder %s112, %s113
      %p124 = scmp.eq.s32.totalorder %s23, 0
      %p125 = por %p123, %p124
      %p126 = scmp.ne.s32.totalorder %s112, %s113
      %p127 = scmp.eq.s32.totalorder %s24, 1
      %p128 = por %p126, %p127
      %p130 = scmp.ne.s32.totalorder %s113, %s129
      %p131 = scmp.eq.s32.totalorder %s24, 0
      %p132 = por %p130, %p131
      %s133 = ssub.s32 %s25, %s44
      %s134 = ssub.s32 %s26, %s40
      %s135 = sor.u32 %s133, %s134
      %p136 = scmp.eq.s32.totalorder %s135, 0
      %s138 = sadd.s32 %s137, 1
      %s139 = scalar_select %p136, %s137, %s138
      %p142 = pneg %p136
      %p143 = scmp.eq.s32.totalorder %s18, 1
      %p144 = por %p142, %p143
      %p145 = scmp.ne.s32.totalorder %s137, %s140
      %p146 = scmp.eq.s32.totalorder %s18, 0
      %p147 = por %p145, %p146
      %p148 = scmp.ne.s32.totalorder %s137, %s140
      %p149 = scmp.eq.s32.totalorder %s23, 1
      %p150 = por %p148, %p149
      %p151 = scmp.ne.s32.totalorder %s140, %s141
      %p152 = scmp.eq.s32.totalorder %s23, 0
      %p153 = por %p151, %p152
      %p154 = scmp.ne.s32.totalorder %s140, %s141
      %p155 = scmp.eq.s32.totalorder %s24, 1
      %p156 = por %p154, %p155
      %p158 = scmp.ne.s32.totalorder %s141, %s157
      %p159 = scmp.eq.s32.totalorder %s24, 0
      %p160 = por %p158, %p159
      %s161 = ssub.s32 %s25, %s44
      %s162 = ssub.s32 %s26, %s40
      %s163 = sor.u32 %s161, %s162
      %p164 = scmp.eq.s32.totalorder %s163, 0
      %s166 = sadd.s32 %s165, 1
      %s167 = scalar_select %p164, %s165, %s166
      %p170 = pneg %p164
      %p171 = scmp.eq.s32.totalorder %s18, 1
      %p172 = por %p170, %p171
      %p173 = scmp.ne.s32.totalorder %s165, %s168
      %p174 = scmp.eq.s32.totalorder %s18, 0
      %p175 = por %p173, %p174
      %p176 = scmp.ne.s32.totalorder %s165, %s168
      %p177 = scmp.eq.s32.totalorder %s23, 1
      %p178 = por %p176, %p177
      %p179 = scmp.ne.s32.totalorder %s168, %s169
      %p180 = scmp.eq.s32.totalorder %s23, 0
      %p181 = por %p179, %p180
      %p182 = scmp.ne.s32.totalorder %s168, %s169
      %p183 = scmp.eq.s32.totalorder %s24, 1
      %p184 = por %p182, %p183
      %p186 = scmp.ne.s32.totalorder %s169, %s185
      %p187 = scmp.eq.s32.totalorder %s24, 0
      %p188 = por %p186, %p187
      %s189 = ssub.s32 %s25, %s44
      %s190 = ssub.s32 %s26, %s40
      %s191 = sor.u32 %s189, %s190
      %p192 = scmp.eq.s32.totalorder %s191, 0
      %s194 = sadd.s32 %s193, 1
      %s195 = scalar_select %p192, %s193, %s194
      %p198 = pneg %p192
      %p199 = scmp.eq.s32.totalorder %s18, 1
      %p200 = por %p198, %p199
      %p201 = scmp.ne.s32.totalorder %s193, %s196
      %p202 = scmp.eq.s32.totalorder %s18, 0
      %p203 = por %p201, %p202
      %p204 = scmp.ne.s32.totalorder %s193, %s196
      %p205 = scmp.eq.s32.totalorder %s23, 1
      %p206 = por %p204, %p205
      %p207 = scmp.ne.s32.totalorder %s196, %s197
      %p208 = scmp.eq.s32.totalorder %s23, 0
      %p209 = por %p207, %p208
      %p210 = scmp.ne.s32.totalorder %s196, %s197
      %p211 = scmp.eq.s32.totalorder %s24, 1
      %p212 = por %p210, %p211
      %p214 = scmp.ne.s32.totalorder %s197, %s213
      %p215 = scmp.eq.s32.totalorder %s24, 0
      %p216 = por %p214, %p215
      %p217 = scmp.le.s32.totalorder 1, %s18
      %p218 = scmp.lt.s32.totalorder %s18, 3
      %p219 = pnand %p217, %p218
      %p220 = pneg %p219
      // Predicated region
      $region9: #{tpu_custom_call.1} parent=5 // pred_check
        _
      $region10: #{tpu_custom_call.1} parent=5 // pred_check_branch
        %222 = sbr.rel (%p219) target = $region12
      $region11: #{tpu_custom_call.1} parent=5 // pred_region
        %s223 = ssub.s32 %s18, 1
      $region12: #{tpu_custom_call.1} parent=5 // pred_fallthru
        _
      %p224 = scmp.lt.s32.totalorder %s18, 2
      // Predicated region
      $region13: #{tpu_custom_call.1} parent=5 // pred_check
        %p225 = pneg %p224
      $region14: #{tpu_custom_call.1} parent=5 // pred_check_branch
        %227 = sbr.rel (%p225) target = $region16
      $region15: #{tpu_custom_call.1} parent=5 // pred_region
        // Predicated region
        $region17: #{tpu_custom_call.1} parent=15 // pred_check
          %p228 = pneg %p61
        $region18: #{tpu_custom_call.1} parent=15 // pred_check_branch
          %230 = sbr.rel (%p228) target = $region20
        $region19: #{tpu_custom_call.1} parent=15 // pred_region
          %s231 = sand.u32 %s51, 1
          %s232 = scalar_lea.sflag [#allocation7], %s231
          %s233 = sand.u32 %s51, 1
          %s234 = smul.addr %s233, 8
          %s235 = scalar_lea.vmem [#allocation6], %s234
          %s236 = sadd.s32 %s25, %s27
          %s237 = smul.u32 2, %s236
          %s239 = ssub.s32 128, 128
          %240 = vsyncadd %s232, %s239
          %s241 = smul.addr %s26, 2
          %s242 = sadd.s32 %s237, %s241
          %s243 = smul.addr %s242, 64
          %s244 = scalar_lea.hbm %s0, %s243
          %s246 = sshll.u32 %s235, 4
          %s247 = int_to_ptr.vmem [resolvable:$true] %s246
          %249 = dma.hbm_to_vmem [thread:$0]  %s244, 128, %s247, %s232
        $region20: #{tpu_custom_call.1} parent=15 // pred_fallthru
          _
        // Predicated region
        $region21: #{tpu_custom_call.1} parent=15 // pred_check
          %p250 = pneg %p91
        $region22: #{tpu_custom_call.1} parent=15 // pred_check_branch
          %252 = sbr.rel (%p250) target = $region24
        $region23: #{tpu_custom_call.1} parent=15 // pred_region
          %s253 = sand.u32 %s81, 1
          %s254 = scalar_lea.sflag [#allocation9], %s253
          %s255 = sand.u32 %s81, 1
          %s256 = smul.addr %s255, 2
          %s257 = scalar_lea.vmem [#allocation8], %s256
          %s258 = sadd.s32 %s25, %s27
          %s259 = smul.u32 2, %s258
          %s261 = ssub.s32 32, 32
          %262 = vsyncadd %s254, %s261
          %s263 = smul.addr %s26, 2
          %s264 = sadd.s32 %s259, %s263
          %s265 = smul.addr %s264, 16
          %s266 = scalar_lea.hbm %s1, %s265
          %s268 = sshll.u32 %s257, 4
          %s269 = int_to_ptr.vmem [resolvable:$true] %s268
          %271 = dma.hbm_to_vmem [thread:$0]  %s266, 32, %s269, %s254
        $region24: #{tpu_custom_call.1} parent=15 // pred_fallthru
          _
      $region16: #{tpu_custom_call.1} parent=5 // pred_fallthru
        _
      %p272 = scmp.le.s32.totalorder 1, %s18
      %p273 = scmp.lt.s32.totalorder %s18, 3
      %p274 = pnand %p272, %p273
      %p275 = pneg %p274
      // Predicated region
      $region25: #{tpu_custom_call.1} parent=5 // pred_check
        _
      $region26: #{tpu_custom_call.1} parent=5 // pred_check_branch
        %277 = sbr.rel (%p274) target = $region28
      $region27: #{tpu_custom_call.1} parent=5 // pred_region
        %s278 = ssub.s32 %s18, 1
        %s279 = sand.u32 %s54, 1
        %s280 = scalar_lea.sflag [#allocation7], %s279
        %s281 = sand.u32 %s54, 1
        %s282 = smul.addr %s281, 8
        %s283 = scalar_lea.vmem [#allocation6], %s282
        // Predicated region
        $region29: #{tpu_custom_call.1} parent=27 // pred_check
          %p284 = pneg %p67
        $region30: #{tpu_custom_call.1} parent=27 // pred_check_branch
          %286 = sbr.rel (%p284) target = $region32
        $region31: #{tpu_custom_call.1} parent=27 // pred_region
          %287 = dma.done %s280, 128
        $region32: #{tpu_custom_call.1} parent=27 // pred_fallthru
          _
        %s288 = sand.u32 %s84, 1
        %s289 = scalar_lea.sflag [#allocation9], %s288
        %s290 = sand.u32 %s84, 1
        %s291 = smul.addr %s290, 2
        %s292 = scalar_lea.vmem [#allocation8], %s291
        // Predicated region
        $region33: #{tpu_custom_call.1} parent=27 // pred_check
          %p293 = pneg %p97
        $region34: #{tpu_custom_call.1} parent=27 // pred_check_branch
          %295 = sbr.rel (%p293) target = $region36
        $region35: #{tpu_custom_call.1} parent=27 // pred_region
          %296 = dma.done %s289, 32
        $region36: #{tpu_custom_call.1} parent=27 // pred_fallthru
          _
        %s297 = sand.u32 %s54, 1
        %s298 = scalar_lea.sflag [#allocation7], %s297
        %s299 = sand.u32 %s54, 1
        %s300 = smul.addr %s299, 8
        %s301 = scalar_lea.vmem [#allocation6], %s300
        %p302 = pneg %p67
        %p303 = pneg %p64
        %s304 = sand.u32 %s84, 1
        %s305 = scalar_lea.sflag [#allocation9], %s304
        %s306 = sand.u32 %s84, 1
        %s307 = smul.addr %s306, 2
        %s308 = scalar_lea.vmem [#allocation8], %s307
        %p309 = pneg %p97
        %p310 = pneg %p94
        %p311 = pneg %p125
        %p312 = pneg %p122
        %p313 = scmp.lt.s32.totalorder %s28, 0
        %s314 = scalar_select %p313, %s28, 0
        %p315 = scmp.lt.s32.totalorder %s29, 1
        %s316 = scalar_select %p315, %s29, 1
        %s317 = smul.addr %s314, 2
        %s318 = sadd.s32 %s316, %s317
        %s319 = smul.addr %s318, 4
        %s320 = scalar_lea.vmem %s2, %s319
        %p321 = pneg %p153
        %p322 = pneg %p150
        %p323 = scmp.lt.s32.totalorder %s28, 0
        %s324 = scalar_select %p323, %s28, 0
        %p325 = scmp.lt.s32.totalorder %s29, 1
        %s326 = scalar_select %p325, %s29, 1
        %s327 = smul.addr %s324, 2
        %s328 = sadd.s32 %s326, %s327
        %s329 = smul.addr %s328, 4
        %s330 = scalar_lea.vmem %s3, %s329
        %p331 = pneg %p181
        %p332 = pneg %p178
        %p333 = scmp.lt.s32.totalorder %s28, 0
        %s334 = scalar_select %p333, %s28, 0
        %p335 = scmp.lt.s32.totalorder %s29, 1
        %s336 = scalar_select %p335, %s29, 1
        %s337 = smul.addr %s334, 2
        %s338 = sadd.s32 %s336, %s337
        %s339 = smul.addr %s338, 4
        %s340 = scalar_lea.vmem %s4, %s339
        %p341 = pneg %p209
        %p342 = pneg %p206
        %p343 = scmp.lt.s32.totalorder %s28, 0
        %s344 = scalar_select %p343, %s28, 0
        %p345 = scmp.lt.s32.totalorder %s29, 1
        %s346 = scalar_select %p345, %s29, 1
        %s347 = smul.addr %s344, 2
        %s348 = sadd.s32 %s346, %s347
        %s349 = scalar_lea.vmem %s5, %s348
        %s350 = sadd.s32 %s28, %s30
        %s351 = smul.u32 2, %s350
        %s352 = sadd.s32 %s28, %s30
        %s353 = smul.u32 2, %s352
        %p354 = scmp.lt.s32.totalorder %s28, 0
        %s355 = scalar_select %p354, %s28, 0
        %p356 = scmp.lt.s32.totalorder %s29, 1
        %s357 = scalar_select %p356, %s29, 1
        %s358 = smul.addr %s355, 2
        %s359 = sadd.s32 %s357, %s358
        %s360 = smul.addr %s359, 4
        %s361 = scalar_lea.vmem %s2, %s360
        %p362 = scmp.lt.s32.totalorder %s28, 0
        %s363 = scalar_select %p362, %s28, 0
        %p364 = scmp.lt.s32.totalorder %s29, 1
        %s365 = scalar_select %p364, %s29, 1
        %s366 = smul.addr %s363, 2
        %s367 = sadd.s32 %s365, %s366
        %s368 = smul.addr %s367, 4
        %s369 = scalar_lea.vmem %s3, %s368
        %p370 = scmp.lt.s32.totalorder %s28, 0
        %s371 = scalar_select %p370, %s28, 0
        %p372 = scmp.lt.s32.totalorder %s29, 1
        %s373 = scalar_select %p372, %s29, 1
        %s374 = smul.addr %s371, 2
        %s375 = sadd.s32 %s373, %s374
        %s376 = smul.addr %s375, 4
        %s377 = scalar_lea.vmem %s4, %s376
        %p378 = scmp.lt.s32.totalorder %s28, 0
        %s379 = scalar_select %p378, %s28, 0
        %p380 = scmp.lt.s32.totalorder %s29, 1
        %s381 = scalar_select %p380, %s29, 1
        %s382 = smul.addr %s379, 2
        %s383 = sadd.s32 %s381, %s382
        %s384 = scalar_lea.vmem %s5, %s383
        %p385 = scmp.eq.s32.totalorder %s30, 0
        // Predicated region
        $region37: #{tpu_custom_call.1} parent=27 // pred_check
          %p386 = pneg %p385
        $region38: #{tpu_custom_call.1} parent=27 // pred_check_branch
          %388 = sbr.rel (%p386) target = $region40
        $region39: #{tpu_custom_call.1} parent=27 // pred_region
          %v389 = vlaneseq
          %vm390 = vcmp.ge.s32.totalorder %v389, 0
          %vm391 = vcmp.lt.s32.totalorder %v389, 256
          %vm392 = vmand %vm390, %vm391
          %393 = vst.msk [vmem:[#allocation2] sm:$0x3] %vm392, 0.0
          %394 = vst [vmem:[#allocation3] sm:$0xff] 0.0
          %395 = vst [vmem:[#allocation4] sm:$0xff] 0.0
          %396 = vst [vmem:[#allocation5] sm:$0xff] 0.0
        $region40: #{tpu_custom_call.1} parent=27 // pred_fallthru
          _
        %s397 = sadd.s32 %s28, %s30
        %s398 = smul.u32 %s397, 256
        %v399 = vlaneseq
        %v400 = vand.u32 %v399, 127
        %v401 = vadd.s32 %v400, 128
        %v402 = vstv %s398
        %v403 = vadd.s32 %v402, %v400
        %v404 = vadd.s32 %v402, %v401
        %vm405 = vcmp.lt.s32.totalorder %v403, 256
        %vm406 = vcmp.lt.s32.totalorder %v404, 256
        %v407 = vsel %vm405, 1, 0
        %v408 = vsel %vm406, 1, 0
        %v409 = vcvt.s32.f32 %v407
        %v410 = vcvt.s32.f32 %v408
        %v411 = vld [vmem:[%s283] sm:$0xff]
        %vm412 = vcmp.eq.s32.totalorder %v407, 1
        %vm413 = vcmp.eq.s32.totalorder %v408, 1
        %v415 = vcombine.high %v411, %v411
        %v417 = vsel %vm412, %v411, 0.0
        %v418 = vsel %vm413, %v415, 0.0
        %v419 = vld [vmem:[%s292] sm:$0x3]
        %vm420 = vcmask 1043456
        %v421 = vsel %vm420, %v417, -inf
        %v422 = vrot.slane %v421, 4
        %v423 = vmax.f32 %v421, %v422
        %v424 = vrot.slane %v423, 2
        %v425 = vmax.f32 %v423, %v424
        %v426 = vrot.slane %v425, 1
        %v427 = vmax.f32 %v425, %v426
        %v428 = vsel %vm420, %v418, -inf
        %v429 = vrot.slane %v428, 4
        %v430 = vmax.f32 %v428, %v429
        %v431 = vrot.slane %v430, 2
        %v432 = vmax.f32 %v430, %v431
        %v433 = vrot.slane %v432, 1
        %v434 = vmax.f32 %v432, %v433
        %v435 = vsub.f32 %v417, %v427
        %v436 = vsub.f32 %v418, %v434
        %v437 = vmul.f32 %v435, 1.442695
        %v438 = vpow.pop %v437
        %v439 = vmul.f32 %v436, 1.442695
        %v440 = vpow.pop %v439
        %v441 = vsel %vm420, %v438, 0.0
        %v442 = vrot.slane %v441, 4
        %v443 = vadd.f32 %v441, %v442
        %v444 = vrot.slane %v443, 2
        %v445 = vadd.f32 %v443, %v444
        %v446 = vrot.slane %v445, 1
        %v447 = vadd.f32 %v445, %v446
        %v448 = vsel %vm420, %v440, 0.0
        %v449 = vrot.slane %v448, 4
        %v450 = vadd.f32 %v448, %v449
        %v451 = vrot.slane %v450, 2
        %v452 = vadd.f32 %v450, %v451
        %v453 = vrot.slane %v452, 1
        %v454 = vadd.f32 %v452, %v453
        %v455 = vrcp.pop %v447
        %v456 = vmul.f32 1.0, %v455
        %v457 = vrcp.pop %v454
        %v458 = vmul.f32 1.0, %v457
        %v459 = vlog2.pop %v447
        %v460 = vmul.f32 %v459, 0.6931472
        %v461 = vlog2.pop %v454
        %v462 = vmul.f32 %v461, 0.6931472
        %v463 = vadd.f32 %v427, %v460
        %v464 = vadd.f32 %v434, %v462
        %v465 = vmul.f32 %v438, %v456
        %v466 = vmul.f32 %v440, %v458
        %v467 = vlaneseq
        %v468 = vshrl.u32 %v467, 7
        %v469 = vlaneseq
        %v470 = vshrl.u32 %v469, 7
        %v471 = vsub.s32 0, %v470
        %v472 = vrot.slane %v419, %v471
        %v473 = vlaneseq
        %v474 = vshrl.u32 %v473, 7
        %v475 = vsub.s32 1, %v474
        %v476 = vrot.slane %v419, %v475
        %vm477 = vcmp.eq.s32.totalorder %v468, %v472
        %vm478 = vcmp.eq.s32.totalorder %v468, %v476
        %v479 = vsel %vm477, 1, 0
        %v480 = vsel %vm478, 1, 0
        %v481 = vcvt.s32.f32 %v479
        %v482 = vcvt.s32.f32 %v480
        %v483 = vmul.f32 %v481, %v409
        %v484 = vmul.f32 %v482, %v410
        %v485 = vmul.f32 %v417, %v483
        %v486 = vmul.f32 %v418, %v484
        %v487 = vsel %vm420, %v485, 0.0
        %v488 = vrot.slane %v487, 4
        %v489 = vadd.f32 %v487, %v488
        %v490 = vrot.slane %v489, 2
        %v491 = vadd.f32 %v489, %v490
        %v492 = vrot.slane %v491, 1
        %v493 = vadd.f32 %v491, %v492
        %v494 = vsel %vm420, %v486, 0.0
        %v495 = vrot.slane %v494, 4
        %v496 = vadd.f32 %v494, %v495
        %v497 = vrot.slane %v496, 2
        %v498 = vadd.f32 %v496, %v497
        %v499 = vrot.slane %v498, 1
        %v500 = vadd.f32 %v498, %v499
        %v501 = vsub.f32 %v463, %v493
        %v502 = vsub.f32 %v464, %v500
        %v503 = vmul.f32 %v501, %v409
        %v504 = vmul.f32 %v502, %v410
        %v505 = vmul.f32 %v465, %v409
        %v506 = vmul.f32 %v466, %v410
        %v507 = vld [vmem:[#allocation2] sm:$0x3]
        %v510 = vcombine.low %v503, %v504
        %v512 = vunpack.c.l.s4 1966171168
        %v513 = vunpack.c.0.s8 %v512
        %v514 = vlaneseq
        %v515 = vshrl.u32 %v514, 7
        %v516 = vsub.s32 %v513, %v515
        %v517 = vrot.slane %v510, %v516
        %v519 = vunpack.c.l.s4 1966171168
        %v520 = vunpack.c.0.s8 %v519
        %v521 = vlaneseq
        %v522 = vshrl.u32 %v521, 7
        %v523 = vsub.s32 %v520, %v522
        %v524 = vrot.slane %v517, %v523
        %v526 = vadd.f32 %v507, %v524
        %v527 = vlaneseq
        %vm528 = vcmp.ge.s32.totalorder %v527, 0
        %vm529 = vcmp.lt.s32.totalorder %v527, 256
        %vm530 = vmand %vm528, %vm529
        %531 = vst.msk [vmem:[#allocation2] sm:$0x3] %vm530, %v526
        %v532 = vld [vmem:[#allocation3] sm:$0xff]
        %v533 = vmul.f32 %v505, %v483
        %v534 = vmul.f32 %v506, %v484
        %v537 = vcombine.low %v533, %v534
        %v539 = vadd.f32 %v532, %v537
        %540 = vst [vmem:[#allocation3] sm:$0xff] %v539
        %v541 = vld [vmem:[#allocation4] sm:$0xff]
        %v544 = vcombine.low %v505, %v506
        %v546 = vadd.f32 %v541, %v544
        %547 = vst [vmem:[#allocation4] sm:$0xff] %v546
        %v548 = vld [vmem:[#allocation5] sm:$0xff]
        %v551 = vcombine.low %v483, %v484
        %v553 = vadd.f32 %v548, %v551
        %554 = vst [vmem:[#allocation5] sm:$0xff] %v553
        // Predicated region
        $region41: #{tpu_custom_call.1} parent=27 // pred_check
          %p555 = pneg %p385
        $region42: #{tpu_custom_call.1} parent=27 // pred_check_branch
          %557 = sbr.rel (%p555) target = $region44
        $region43: #{tpu_custom_call.1} parent=27 // pred_region
          %v558 = vld [vmem:[#allocation3] sm:$0xff]
          %v560 = vcombine.high %v558, %v558
          %v562 = vsel %vm420, %v558, 0.0
          %v563 = vsel %vm420, %v560, 0.0
          %v564 = vadd.f32 %v562, %v563
          %565 = vadd.xlane.f32.xlu0 %v564
          %v566 = vpop.xlane.xlu0 %565
          %vm567 = vcmask 3072
          %568 = vst.msk [vmem:[%s361] sm:$0xf] %vm567, %v566
          %v569 = vld [vmem:[#allocation4] sm:$0xff]
          %v571 = vcombine.high %v569, %v569
          %v573 = vsel %vm420, %v569, 0.0
          %v574 = vsel %vm420, %v571, 0.0
          %v575 = vadd.f32 %v573, %v574
          %576 = vadd.xlane.f32.xlu0 %v575
          %v577 = vpop.xlane.xlu0 %576
          %578 = vst.msk [vmem:[%s369] sm:$0xf] %vm567, %v577
          %v579 = vld [vmem:[#allocation5] sm:$0xff]
          %v581 = vcombine.high %v579, %v579
          %v583 = vsel %vm420, %v579, 0.0
          %v584 = vsel %vm420, %v581, 0.0
          %v585 = vadd.f32 %v583, %v584
          %586 = vadd.xlane.f32.xlu0 %v585
          %v587 = vpop.xlane.xlu0 %586
          %588 = vst.msk [vmem:[%s377] sm:$0xf] %vm567, %v587
          %v589 = vld [vmem:[#allocation2] sm:$0x3]
          %v591 = vlaneseq
          %v592 = vshrl.u32 %v591, 7
          %v593 = vsub.s32 0, %v592
          %v594 = vrot.slane %v589, %v593
          %v595 = vlaneseq
          %v596 = vshrl.u32 %v595, 7
          %v597 = vsub.s32 1, %v596
          %v598 = vrot.slane %v589, %v597
          %vm601 = vcmask 1040384
          %v602 = vsel %vm601, %v594, 0.0
          %v603 = vsel %vm601, %v598, 0.0
          %v604 = vadd.f32 %v602, %v603
          %605 = vadd.xlane.f32.xlu0 %v604
          %v606 = vpop.xlane.xlu0 %605
          %vm607 = vcmask 0
          %608 = vst.msk [vmem:[%s384] sm:$0x1] %vm607, %v606
        $region44: #{tpu_custom_call.1} parent=27 // pred_fallthru
          _
        %p609 = scmp.lt.s32.totalorder %s28, 0
        %s610 = scalar_select %p609, %s28, 0
        %p611 = scmp.lt.s32.totalorder %s29, 1
        %s612 = scalar_select %p611, %s29, 1
        %s613 = smul.addr %s610, 2
        %s614 = sadd.s32 %s612, %s613
        %s615 = smul.addr %s614, 4
        %s616 = scalar_lea.vmem %s2, %s615
        %p617 = scmp.lt.s32.totalorder %s28, 0
        %s618 = scalar_select %p617, %s28, 0
        %p619 = scmp.lt.s32.totalorder %s29, 1
        %s620 = scalar_select %p619, %s29, 1
        %s621 = smul.addr %s618, 2
        %s622 = sadd.s32 %s620, %s621
        %s623 = smul.addr %s622, 4
        %s624 = scalar_lea.vmem %s3, %s623
        %p625 = scmp.lt.s32.totalorder %s28, 0
        %s626 = scalar_select %p625, %s28, 0
        %p627 = scmp.lt.s32.totalorder %s29, 1
        %s628 = scalar_select %p627, %s29, 1
        %s629 = smul.addr %s626, 2
        %s630 = sadd.s32 %s628, %s629
        %s631 = smul.addr %s630, 4
        %s632 = scalar_lea.vmem %s4, %s631
        %p633 = scmp.lt.s32.totalorder %s28, 0
        %s634 = scalar_select %p633, %s28, 0
        %p635 = scmp.lt.s32.totalorder %s29, 1
        %s636 = scalar_select %p635, %s29, 1
        %s637 = smul.addr %s634, 2
        %s638 = sadd.s32 %s636, %s637
        %s639 = scalar_lea.vmem %s5, %s638
        // Predicated region
        $region45: #{tpu_custom_call.1} parent=27 // pred_check
          %p640 = pneg %p122
        $region46: #{tpu_custom_call.1} parent=27 // pred_check_branch
          %642 = sbr.rel (%p640) target = $region48
        $region47: #{tpu_custom_call.1} parent=27 // pred_region
          _
        $region48: #{tpu_custom_call.1} parent=27 // pred_fallthru
          _
        // Predicated region
        $region49: #{tpu_custom_call.1} parent=27 // pred_check
          %p643 = pneg %p150
        $region50: #{tpu_custom_call.1} parent=27 // pred_check_branch
          %645 = sbr.rel (%p643) target = $region52
        $region51: #{tpu_custom_call.1} parent=27 // pred_region
          _
        $region52: #{tpu_custom_call.1} parent=27 // pred_fallthru
          _
        // Predicated region
        $region53: #{tpu_custom_call.1} parent=27 // pred_check
          %p646 = pneg %p178
        $region54: #{tpu_custom_call.1} parent=27 // pred_check_branch
          %648 = sbr.rel (%p646) target = $region56
        $region55: #{tpu_custom_call.1} parent=27 // pred_region
          _
        $region56: #{tpu_custom_call.1} parent=27 // pred_fallthru
          _
        // Predicated region
        $region57: #{tpu_custom_call.1} parent=27 // pred_check
          %p649 = pneg %p206
        $region58: #{tpu_custom_call.1} parent=27 // pred_check_branch
          %651 = sbr.rel (%p649) target = $region60
        $region59: #{tpu_custom_call.1} parent=27 // pred_region
          _
        $region60: #{tpu_custom_call.1} parent=27 // pred_fallthru
          _
      $region28: #{tpu_custom_call.1} parent=5 // pred_fallthru
        _
      %p652 = scmp.le.s32.totalorder 2, %s18
      // Predicated region
      $region61: #{tpu_custom_call.1} parent=5 // pred_check
        %p653 = pneg %p652
      $region62: #{tpu_custom_call.1} parent=5 // pred_check_branch
        %655 = sbr.rel (%p653) target = $region64
      $region63: #{tpu_custom_call.1} parent=5 // pred_region
        %s656 = ssub.s32 %s18, 2
        // Predicated region
        $region65: #{tpu_custom_call.1} parent=63 // pred_check
          %p657 = pneg %p128
        $region66: #{tpu_custom_call.1} parent=63 // pred_check_branch
          %659 = sbr.rel (%p657) target = $region68
        $region67: #{tpu_custom_call.1} parent=63 // pred_region
          %p660 = scmp.lt.s32.totalorder %s31, 0
          %s661 = scalar_select %p660, %s31, 0
          %p662 = scmp.lt.s32.totalorder %s32, 1
          %s663 = scalar_select %p662, %s32, 1
          %s664 = smul.addr %s661, 2
          %s665 = sadd.s32 %s663, %s664
          %s666 = smul.addr %s665, 4
          %s667 = scalar_lea.vmem %s2, %s666
        $region68: #{tpu_custom_call.1} parent=63 // pred_fallthru
          _
        // Predicated region
        $region69: #{tpu_custom_call.1} parent=63 // pred_check
          %p668 = pneg %p156
        $region70: #{tpu_custom_call.1} parent=63 // pred_check_branch
          %670 = sbr.rel (%p668) target = $region72
        $region71: #{tpu_custom_call.1} parent=63 // pred_region
          %p671 = scmp.lt.s32.totalorder %s31, 0
          %s672 = scalar_select %p671, %s31, 0
          %p673 = scmp.lt.s32.totalorder %s32, 1
          %s674 = scalar_select %p673, %s32, 1
          %s675 = smul.addr %s672, 2
          %s676 = sadd.s32 %s674, %s675
          %s677 = smul.addr %s676, 4
          %s678 = scalar_lea.vmem %s3, %s677
        $region72: #{tpu_custom_call.1} parent=63 // pred_fallthru
          _
        // Predicated region
        $region73: #{tpu_custom_call.1} parent=63 // pred_check
          %p679 = pneg %p184
        $region74: #{tpu_custom_call.1} parent=63 // pred_check_branch
          %681 = sbr.rel (%p679) target = $region76
        $region75: #{tpu_custom_call.1} parent=63 // pred_region
          %p682 = scmp.lt.s32.totalorder %s31, 0
          %s683 = scalar_select %p682, %s31, 0
          %p684 = scmp.lt.s32.totalorder %s32, 1
          %s685 = scalar_select %p684, %s32, 1
          %s686 = smul.addr %s683, 2
          %s687 = sadd.s32 %s685, %s686
          %s688 = smul.addr %s687, 4
          %s689 = scalar_lea.vmem %s4, %s688
        $region76: #{tpu_custom_call.1} parent=63 // pred_fallthru
          _
        // Predicated region
        $region77: #{tpu_custom_call.1} parent=63 // pred_check
          %p690 = pneg %p212
        $region78: #{tpu_custom_call.1} parent=63 // pred_check_branch
          %692 = sbr.rel (%p690) target = $region80
        $region79: #{tpu_custom_call.1} parent=63 // pred_region
          %p693 = scmp.lt.s32.totalorder %s31, 0
          %s694 = scalar_select %p693, %s31, 0
          %p695 = scmp.lt.s32.totalorder %s32, 1
          %s696 = scalar_select %p695, %s32, 1
          %s697 = smul.addr %s694, 2
          %s698 = sadd.s32 %s696, %s697
          %s699 = scalar_lea.vmem %s5, %s698
        $region80: #{tpu_custom_call.1} parent=63 // pred_fallthru
          _
      $region64: #{tpu_custom_call.1} parent=5 // pred_fallthru
        _
    $region6: #{tpu_custom_call.1} parent=1 // loop_footer
      %s22 = sadd.s32 1, %s18
    $region7: #{tpu_custom_call.1} parent=1 // loop_footer_branch
      %17 = sbr.rel target = $region3
    $region8: #{tpu_custom_call.1} parent=1 // loop_exit
      _
    %700 = vsyncpa [#allocation7], 1
    %s701 = scalar_lea.sflag [#allocation7], 1
    %702 = vsyncpa %s701, 1
    %703 = vsyncpa [#allocation9], 1
    %s704 = scalar_lea.sflag [#allocation9], 1
    %705 = vsyncpa %s704, 1

</llo_original>
